<compile_context>
chip_gen: v6e
topology: v6e:2x2x1
jax: 0.10.0
libtpu: 0.0.40
codegen_flags: <defaults>
</compile_context>

<pallas_src>
import math

import jax
import jax.numpy as jnp
from jax import lax
from jax.experimental import pallas as pl
from jax.experimental.pallas import tpu as pltpu


_VMEM_LIMIT = 32 * 1024 * 1024


def _pick_tile_t(T, cap=64):
    """Largest divisor of T that is <= cap (bounds the VMEM-resident chunk)."""
    t = min(T, cap)
    while T % t:
        t -= 1
    return t


# ---------------------------------------------------------------------------
# Kernel bodies
# ---------------------------------------------------------------------------
def _proj_x_kernel(x_ref, w_ref, b_ref, o_ref):
    """Hoisted input projection for layer 0.

    x_ref: (TILE_T, B, D)  w_ref: (D, 8H)  b_ref: (1, 8H)  o_ref: (TILE_T, B, 8H)
    One big GEMM over a T-chunk; 8H = both directions' gate-stacked weights.
    """
    TT, B, D = x_ref.shape
    x2 = x_ref[...].reshape(TT * B, D)
    y = jnp.dot(x2, w_ref[...], preferred_element_type=jnp.float32) + b_ref[...]
    o_ref[...] = y.reshape(o_ref.shape).astype(o_ref.dtype)


def _proj_pair_kernel(h_ref, w_ref, b_ref, o_ref):
    """Projection of a bidirectional activation (2, TILE_T, B, H) -> (TILE_T, B, G).

    Used for (a) the hoisted input projection of layer >= 1 (G = 8H) and
    (b) the final Linear (G = num_classes padded to 128).  Consuming the two
    direction planes directly removes the HBM concatenate between layers.
    """
    _, TT, B, H = h_ref.shape
    hf = h_ref[0].reshape(TT * B, H)
    hb = h_ref[1].reshape(TT * B, H)
    w = w_ref[...]
    y = (jnp.dot(hf, w[:H], preferred_element_type=jnp.float32)
         + jnp.dot(hb, w[H:], preferred_element_type=jnp.float32)
         + b_ref[...])
    o_ref[...] = y.reshape(o_ref.shape).astype(o_ref.dtype)


def _bilstm_rec_kernel(xg_ref, whh_ref, out_ref, h_scr, c_scr):
    """Recurrent part of one bidirectional LSTM layer.

    grid = (2 directions, num T-chunks); bias + x@W_ih are precomputed.

    xg_ref:  (TILE_T, B, 4H)  precomputed gate projection for this direction
    whh_ref: (2, H, 4H)       gate-fused recurrent weights (fwd, bwd)
    out_ref: (TILE_T, B, H)   hidden states for this (direction, chunk)
    h_scr/c_scr: (B, H) f32   recurrent state carried across T-chunks
    """
    d = pl.program_id(0)           # 0 = forward, 1 = backward
    tc = pl.program_id(1)          # position along the grid's time axis
    TT = xg_ref.shape[0]
    H = whh_ref.shape[1]

    @pl.when(tc == 0)
    def _():
        h_scr[...] = jnp.zeros_like(h_scr)
        c_scr[...] = jnp.zeros_like(c_scr)

    w_hh = whh_ref[d]              # (H, 4H) — hoisted out of the loop

    # TODO(synk): for large B/H, cast the matmul operands to bf16 and pad the
    # per-step (B, H) store to a full (8, 128) tile; kept f32/unpadded here to
    # preserve bit-accuracy vs the f32 reference at these tiny shapes.
    def step(i, carry):
        # forward walks 0..TT-1, backward walks TT-1..0 within the chunk
        t = i * (1 - d) + (TT - 1 - i) * d
        gates = xg_ref[t] + jnp.dot(h_scr[...], w_hh,
                                    preferred_element_type=jnp.float32)
        i_g = jax.nn.sigmoid(gates[:, :H])
        f_g = jax.nn.sigmoid(gates[:, H:2 * H])
        g_g = jnp.tanh(gates[:, 2 * H:3 * H])
        o_g = jax.nn.sigmoid(gates[:, 3 * H:])
        c_new = f_g * c_scr[...] + i_g * g_g
        h_new = o_g * jnp.tanh(c_new)
        c_scr[...] = c_new
        h_scr[...] = h_new
        out_ref[t] = h_new.astype(out_ref.dtype)
        return carry

    # unroll=2: lets the scheduler overlap step t's EUP/VPU work with step t+1's
    # recurrent matmul issue.
    lax.fori_loop(0, TT, step, 0, unroll=2)


# ---------------------------------------------------------------------------
# pallas_call wrappers
# ---------------------------------------------------------------------------
def project_first(x_tbd, w, b, tile_t):
    T, B, D = x_tbd.shape
    G = w.shape[1]
    nT = T // tile_t
    return pl.pallas_call(
        _proj_x_kernel,
        out_shape=jax.ShapeDtypeStruct((T, B, G), jnp.float32),
        grid=(nT,),
        in_specs=[pl.BlockSpec((tile_t, B, D), lambda t: (t, 0, 0)),
                  pl.BlockSpec((D, G), lambda t: (0, 0)),
                  pl.BlockSpec((1, G), lambda t: (0, 0))],
        out_specs=pl.BlockSpec((tile_t, B, G), lambda t: (t, 0, 0)),
        compiler_params=pltpu.CompilerParams(
            dimension_semantics=("parallel",),
            vmem_limit_bytes=_VMEM_LIMIT),
    )(x_tbd, w, b)


def project_pair(h_2tbh, w, b, tile_t):
    _, T, B, H = h_2tbh.shape
    G = w.shape[1]
    nT = T // tile_t
    return pl.pallas_call(
        _proj_pair_kernel,
        out_shape=jax.ShapeDtypeStruct((T, B, G), jnp.float32),
        grid=(nT,),
        in_specs=[pl.BlockSpec((2, tile_t, B, H), lambda t: (0, t, 0, 0)),
                  pl.BlockSpec((2 * H, G), lambda t: (0, 0)),
                  pl.BlockSpec((1, G), lambda t: (0, 0))],
        out_specs=pl.BlockSpec((tile_t, B, G), lambda t: (t, 0, 0)),
        compiler_params=pltpu.CompilerParams(
            dimension_semantics=("parallel",),
            vmem_limit_bytes=_VMEM_LIMIT),
    )(h_2tbh, w, b)


def bilstm_recurrence(xg_tbg, w_hh_both, tile_t):
    T, B, G8 = xg_tbg.shape
    H = w_hh_both.shape[1]
    assert G8 == 8 * H
    assert (4 * H) % 128 == 0, "hidden_dim must be a multiple of 32 (lane alignment)"
    nT = T // tile_t
    return pl.pallas_call(
        _bilstm_rec_kernel,
        out_shape=jax.ShapeDtypeStruct((2, T, B, H), jnp.float32),
        grid=(2, nT),
        in_specs=[
            # direction d reads its 4H gate columns; backward walks chunks in reverse
            pl.BlockSpec((tile_t, B, 4 * H),
                         lambda d, t: (t * (1 - d) + (nT - 1 - t) * d, 0, d)),
            pl.BlockSpec((2, H, 4 * H), lambda d, t: (0, 0, 0)),
        ],
        out_specs=pl.BlockSpec((None, tile_t, B, H),
                               lambda d, t: (d, t * (1 - d) + (nT - 1 - t) * d, 0, 0)),
        scratch_shapes=[pltpu.VMEM((B, H), jnp.float32),
                        pltpu.VMEM((B, H), jnp.float32)],
        compiler_params=pltpu.CompilerParams(
            dimension_semantics=("parallel", "arbitrary"),
            vmem_limit_bytes=_VMEM_LIMIT),
    )(xg_tbg, w_hh_both)


# ---------------------------------------------------------------------------
# Parameter construction (deterministic, PyTorch-style uniform init)
# ---------------------------------------------------------------------------
def _torch_layer_to_kernel(fwd, bwd, H):
    """PyTorch (4H,Din)/(4H,H)/(4H,) params -> fused kernel layout."""
    w_ih_f, w_hh_f, b_ih_f, b_hh_f = fwd
    w_ih_b, w_hh_b, b_ih_b, b_hh_b = bwd
    w_ih_both = jnp.concatenate([w_ih_f.T, w_ih_b.T], axis=1)            # (Din, 8H)
    b_both = jnp.concatenate([b_ih_f + b_hh_f,
                              b_ih_b + b_hh_b]).reshape(1, 8 * H)        # (1, 8H)
    w_hh_both = jnp.stack([w_hh_f.T, w_hh_b.T], axis=0)                  # (2, H, 4H)
    return {"w_ih": w_ih_both, "b": b_both, "w_hh": w_hh_both}


def init_params(key, input_dim, hidden_dim, num_classes):
    H = hidden_dim
    k_lstm = 1.0 / math.sqrt(H)
    params = {"layers": []}
    for layer in range(2):
        in_size = input_dim if layer == 0 else 2 * H
        raw = {}
        for direction in ("fwd", "bwd"):
            key, k1, k2, k3, k4 = jax.random.split(key, 5)
            w_ih = jax.random.uniform(k1, (4 * H, in_size), jnp.float32, -k_lstm, k_lstm)
            w_hh = jax.random.uniform(k2, (4 * H, H), jnp.float32, -k_lstm, k_lstm)
            b_ih = jax.random.uniform(k3, (4 * H,), jnp.float32, -k_lstm, k_lstm)
            b_hh = jax.random.uniform(k4, (4 * H,), jnp.float32, -k_lstm, k_lstm)
            raw[direction] = (w_ih, w_hh, b_ih, b_hh)
        params["layers"].append({
            "torch": raw,
            "kernel": _torch_layer_to_kernel(raw["fwd"], raw["bwd"], H),
        })

    k_fc = 1.0 / math.sqrt(2 * H)
    key, k1, k2 = jax.random.split(key, 3)
    w_fc = jax.random.uniform(k1, (num_classes, 2 * H), jnp.float32, -k_fc, k_fc)
    b_fc = jax.random.uniform(k2, (num_classes,), jnp.float32, -k_fc, k_fc)
    params["fc_torch"] = (w_fc, b_fc)

    c_pad = ((num_classes + 127) // 128) * 128                # lane-dense FC output
    w_fc_pad = jnp.zeros((2 * H, c_pad), jnp.float32).at[:, :num_classes].set(w_fc.T)
    b_fc_pad = jnp.zeros((1, c_pad), jnp.float32).at[:, :num_classes].set(b_fc)
    params["fc_kernel"] = (w_fc_pad, b_fc_pad, num_classes)
    return params


# ---------------------------------------------------------------------------
# Forward passes: Pallas model and pure-JAX reference
# ---------------------------------------------------------------------------
def blstm_forward_pallas(x_btd, params, tile_t=None):
    x = jnp.transpose(x_btd, (1, 0, 2)).astype(jnp.float32)   # (T, B, D)
    T = x.shape[0]
    if tile_t is None:
        tile_t = _pick_tile_t(T)

    # Layer 0: hoisted x@W_ih GEMM (both directions, 8H wide) + recurrence.
    l0 = params["layers"][0]["kernel"]
    xg = project_first(x, l0["w_ih"], l0["b"], tile_t)        # (T, B, 8H)
    h = bilstm_recurrence(xg, l0["w_hh"], tile_t)             # (2, T, B, H)

    # Layer 1: projection consumes the two direction planes directly (no concat).
    l1 = params["layers"][1]["kernel"]
    xg = project_pair(h, l1["w_ih"], l1["b"], tile_t)         # (T, B, 8H)
    h = bilstm_recurrence(xg, l1["w_hh"], tile_t)             # (2, T, B, H)

    # Final Linear, output padded to 128 lanes; slice back to num_classes.
    w_fc_pad, b_fc_pad, C = params["fc_kernel"]
    y = project_pair(h, w_fc_pad, b_fc_pad, tile_t)           # (T, B, C_pad)
    y = y[..., :C]
    return jnp.transpose(y, (1, 0, 2))                        # (B, T, C)


def _lstm_layer_ref(x_tbd, w_ih, w_hh, b_ih, b_hh, reverse):
    T, B, _ = x_tbd.shape
    H = w_hh.shape[1]

    def cell(carry, x_t):
        h, c = carry
        gates = x_t @ w_ih.T + h @ w_hh.T + b_ih + b_hh
        ig, fg, gg, og = jnp.split(gates, 4, axis=-1)
        ig, fg, og = jax.nn.sigmoid(ig), jax.nn.sigmoid(fg), jax.nn.sigmoid(og)
        gg = jnp.tanh(gg)
        c = fg * c + ig * gg
        h = og * jnp.tanh(c)
        return (h, c), h

    xs = x_tbd[::-1] if reverse else x_tbd
    h0 = jnp.zeros((B, H), jnp.float32)
    _, hs = lax.scan(cell, (h0, h0), xs)
    return hs[::-1] if reverse else hs


def blstm_forward_ref(x_btd, params):
    x = jnp.transpose(x_btd, (1, 0, 2)).astype(jnp.float32)
    h = x
    for layer_p in params["layers"]:
        raw = layer_p["torch"]
        h_f = _lstm_layer_ref(h, *raw["fwd"], reverse=False)
        h_b = _lstm_layer_ref(h, *raw["bwd"], reverse=True)
        h = jnp.concatenate([h_f, h_b], axis=-1)
    w_fc, b_fc = params["fc_torch"]
    y = h @ w_fc.T + b_fc
    return jnp.transpose(y, (1, 0, 2))


# ---------------------------------------------------------------------------
if __name__ == "__main__":
    B, T = 2, 8
    input_dim, hidden_dim, num_classes = 16, 32, 10

    key = jax.random.PRNGKey(0)
    kx, kp = jax.random.split(key)
    x = jax.random.normal(kx, (B, T, input_dim), jnp.float32)
    params = init_params(kp, input_dim, hidden_dim, num_classes)

    out = jax.block_until_ready(blstm_forward_pallas(x, params))
    ref = jax.block_until_ready(blstm_forward_ref(x, params))

    assert out.shape == (B, T, num_classes), out.shape
    err = float(jnp.max(jnp.abs(out - ref)))
    assert err < 1e-4, err
    print("KERNEL_OK")
</pallas_src>

<mosaic_0001>
module attributes {stable_mosaic.version = 11 : i64} {
  func.func @_proj_x_kernel(%arg0: i32, %arg1: memref<8x2x16xf32, #tpu.memory_space<vmem>>, %arg2: memref<16x256xf32, #tpu.memory_space<vmem>>, %arg3: memref<1x256xf32, #tpu.memory_space<vmem>>, %arg4: memref<8x2x256xf32, #tpu.memory_space<vmem>>) attributes {dimension_semantics = [#tpu.dimension_semantics<parallel>], iteration_bounds = array<i64: 1>, scalar_prefetch = 0 : i64, scratch_operands = 0 : i64, tpu.core_type = #tpu.core_type<tc>, window_params = [{transform_indices = @transform_0, window_bounds = array<i64: 8, 2, 16>}, {pipeline_mode = #tpu.pipeline_mode<synchronous>, transform_indices = @transform_1, window_bounds = array<i64: 16, 256>}, {pipeline_mode = #tpu.pipeline_mode<synchronous>, transform_indices = @transform_2, window_bounds = array<i64: 1, 256>}, {transform_indices = @transform_3, window_bounds = array<i64: 8, 2, 256>}]} {
    %c0 = arith.constant 0 : index
    %c0_0 = arith.constant 0 : index
    %c0_1 = arith.constant 0 : index
    %0 = vector.load %arg1[%c0, %c0_0, %c0_1] : memref<8x2x16xf32, #tpu.memory_space<vmem>>, vector<8x2x16xf32>
    %1 = vector.shape_cast %0 : vector<8x2x16xf32> to vector<16x16xf32>
    %c0_2 = arith.constant 0 : index
    %c0_3 = arith.constant 0 : index
    %2 = vector.load %arg2[%c0_2, %c0_3] : memref<16x256xf32, #tpu.memory_space<vmem>>, vector<16x256xf32>
    %cst = arith.constant dense<0.000000e+00> : vector<16x256xf32>
    %3 = tpu.matmul %1, %2, %cst {dimension_numbers = #tpu.dot_dimension_numbers<[1], [0], [0], [1], [0, 0, 1, 1], [], []>} : vector<16x16xf32>, vector<16x256xf32>, vector<16x256xf32> -> vector<16x256xf32>
    %c0_4 = arith.constant 0 : index
    %c0_5 = arith.constant 0 : index
    %4 = vector.load %arg3[%c0_4, %c0_5] : memref<1x256xf32, #tpu.memory_space<vmem>>, vector<1x256xf32>
    %5 = vector.broadcast %4 : vector<1x256xf32> to vector<16x256xf32>
    %6 = arith.addf %3, %5 : vector<16x256xf32>
    %7 = vector.shape_cast %6 : vector<16x256xf32> to vector<8x2x256xf32>
    %c0_6 = arith.constant 0 : index
    %c0_7 = arith.constant 0 : index
    %c0_8 = arith.constant 0 : index
    %8 = vector.load %arg4[%c0_6, %c0_7, %c0_8] : memref<8x2x256xf32, #tpu.memory_space<vmem>>, vector<8x2x256xf32>
    tpu.vector_store %arg4[%c0_6, %c0_7, %c0_8], %7 {strides = array<i32>} : memref<8x2x256xf32, #tpu.memory_space<vmem>>, vector<8x2x256xf32>,
    return
  }
  func.func @transform_0(%arg0: i32) -> (i32, i32, i32) {
    %c0_i32 = arith.constant 0 : i32
    %c0_i32_0 = arith.constant 0 : i32
    %c0_i32_1 = arith.constant 0 : i32
    return %arg0, %c0_i32, %c0_i32_0 : i32, i32, i32
  }
  func.func @transform_1(%arg0: i32) -> (i32, i32) {
    %c0_i32 = arith.constant 0 : i32
    %c0_i32_0 = arith.constant 0 : i32
    %c0_i32_1 = arith.constant 0 : i32
    return %c0_i32, %c0_i32_0 : i32, i32
  }
  func.func @transform_2(%arg0: i32) -> (i32, i32) {
    %c0_i32 = arith.constant 0 : i32
    %c0_i32_0 = arith.constant 0 : i32
    %c0_i32_1 = arith.constant 0 : i32
    return %c0_i32, %c0_i32_0 : i32, i32
  }
  func.func @transform_3(%arg0: i32) -> (i32, i32, i32) {
    %c0_i32 = arith.constant 0 : i32
    %c0_i32_0 = arith.constant 0 : i32
    %c0_i32_1 = arith.constant 0 : i32
    return %arg0, %c0_i32, %c0_i32_0 : i32, i32, i32
  }
}

</mosaic_0001>

<llo_original>
// kernel: tpu_custom_call.1
$region0: #{tpu_custom_call.1}
  #allocation0 [shape = 'u32[]', space=smem, size = 0x4, offset = 0x4, fixed_abs, tag = 'smem constant byte address 0x4 - core index']
  #allocation1 [shape = 'u32[144,128]{1,0:T(1,128)}', space=vmem, size = 0x12000, scoped, tag = 'internal scratch']
  %s0 = inlined_call_operand.hbm [shape: f32[8,2,16], index: 0, kind: input, shape index: {}]
  %s1 = inlined_call_operand.hbm [shape: f32[16,256], index: 1, kind: input, shape index: {}]
  %s2 = inlined_call_operand.vmem [shape: f32[1,256], index: 2, kind: input, shape index: {}]
  %s3 = inlined_call_operand.hbm [shape: f32[8,2,256], index: 3, kind: output, shape index: {}]
  %s4 = sld [smem:[#allocation0]]
  $region30: #{tpu_custom_call.1} parent=0
    _
  %s6 = ssub.s32 1, %s4
  %s7 = scalar_select 0, %s6, %s4
  $region1: #{tpu_custom_call.1} parent=0
    #allocation2 [shape = 'u8[8192]{0}', space=vmem, size = 0x2000, scoped, tag = 'input window, operand 0, single buffered']
    #allocation3 [shape = 's32[1]{0}', space=sflag, size = 0x4, scoped, tag = 'scoped memory for tpu_custom_call.1']
    #allocation4 [shape = 's32[1]{0}', space=sflag, size = 0x4, scoped, tag = 'scoped memory for tpu_custom_call.1']
    #allocation5 [shape = 'u8[16384]{0}', space=vmem, size = 0x4000, scoped, tag = 'input window, operand 1, single buffered']
    #allocation6 [shape = 's32[1]{0}', space=sflag, size = 0x4, scoped, tag = 'scoped memory for tpu_custom_call.1']
    #allocation7 [shape = 'u8[16384]{0}', space=vmem, size = 0x4000, scoped, tag = 'output window, operand 0, single buffered']
    %8 = vsyncpa [#allocation3], 0
    %9 = vsyncpa [#allocation6], 0
    %10 = vsyncpa [#allocation4], 0
    // Predicated region
    $region2: #{tpu_custom_call.1} parent=1 // pred_check
      _
    $region3: #{tpu_custom_call.1} parent=1 // pred_check_branch
      %12 = sbr.rel (0) target = $region5
    $region4: #{tpu_custom_call.1} parent=1 // pred_region
      %s14 = ssub.s32 256, 256
      %15 = vsyncadd [#allocation3], %s14
      %s16 = sshll.u32 [#allocation2], 4
      %s17 = int_to_ptr.vmem [resolvable:$true] %s16
      %22 = dma.hbm_to_vmem [thread:$0]  %s0, 256, %s17, [#allocation3], 32, 32, 2
    $region5: #{tpu_custom_call.1} parent=1 // pred_fallthru
      _
    // Predicated region
    $region6: #{tpu_custom_call.1} parent=1 // pred_check
      _
    $region7: #{tpu_custom_call.1} parent=1 // pred_check_branch
      %24 = sbr.rel (0) target = $region9
    $region8: #{tpu_custom_call.1} parent=1 // pred_region
      %s26 = ssub.s32 512, 512
      %27 = vsyncadd [#allocation6], %s26
      %s28 = sshll.u32 [#allocation5], 4
      %s29 = int_to_ptr.vmem [resolvable:$true] %s28
      %34 = dma.hbm_to_vmem [thread:$0]  %s1, 512, %s29, [#allocation6], 256, 256, 16
    $region9: #{tpu_custom_call.1} parent=1 // pred_fallthru
      _
    // Predicated region
    $region10: #{tpu_custom_call.1} parent=1 // pred_check
      _
    $region11: #{tpu_custom_call.1} parent=1 // pred_check_branch
      %36 = sbr.rel (0) target = $region13
    $region12: #{tpu_custom_call.1} parent=1 // pred_region
      _
    $region13: #{tpu_custom_call.1} parent=1 // pred_fallthru
      _
    // Predicated region
    $region14: #{tpu_custom_call.1} parent=1 // pred_check
      _
    $region15: #{tpu_custom_call.1} parent=1 // pred_check_branch
      %38 = sbr.rel (0) target = $region17
    $region16: #{tpu_custom_call.1} parent=1 // pred_region
      %39 = dma.done [#allocation3], 256
    $region17: #{tpu_custom_call.1} parent=1 // pred_fallthru
      _
    // Predicated region
    $region18: #{tpu_custom_call.1} parent=1 // pred_check
      _
    $region19: #{tpu_custom_call.1} parent=1 // pred_check_branch
      %41 = sbr.rel (0) target = $region21
    $region20: #{tpu_custom_call.1} parent=1 // pred_region
      %42 = dma.done [#allocation6], 512
    $region21: #{tpu_custom_call.1} parent=1 // pred_fallthru
      _
    %v43 = vld [vmem:[#allocation2] sm:$0x3]
    %v44 = vld [vmem:[#allocation2 + $0x2] sm:$0x3]
    %v45 = vld [vmem:[#allocation2 + $0x4] sm:$0x3]
    %v46 = vld [vmem:[#allocation2 + $0x6] sm:$0x3]
    %v47 = vld [vmem:[#allocation2 + $0x8] sm:$0x3]
    %v48 = vld [vmem:[#allocation2 + $0xa] sm:$0x3]
    %v49 = vld [vmem:[#allocation2 + $0xc] sm:$0x3]
    %v50 = vld [vmem:[#allocation2 + $0xe] sm:$0x3]
    %v51 = vld [vmem:[#allocation5] sm:$0xff]
    %v52 = vld [vmem:[#allocation5 + $0x8] sm:$0xff]
    %v53 = vld [vmem:[#allocation5 + $0x10] sm:$0xff]
    %v54 = vld [vmem:[#allocation5 + $0x18] sm:$0xff]
    %v55 = vld [vmem:[%s2] sm:$0x3]
    %v57 = vlaneseq
    %v58 = vshrl.u32 %v57, 7
    %v59 = vsub.s32 0, %v58
    %v60 = vrot.slane %v55, %v59
    %v61 = vlaneseq
    %v62 = vshrl.u32 %v61, 7
    %v63 = vsub.s32 1, %v62
    %v64 = vrot.slane %v55, %v63
    %v75 = vcombine.low %v43, %v44
    %v76 = vcombine.low %v45, %v46
    %v78 = vunpack.c.l.s4 1983009808
    %v79 = vunpack.c.0.s8 %v78
    %v80 = vlaneseq
    %v81 = vshrl.u32 %v80, 7
    %v82 = vsub.s32 %v79, %v81
    %v83 = vrot.slane %v75, %v82
    %v85 = vunpack.c.l.s4 1983009808
    %v86 = vunpack.c.0.s8 %v85
    %v87 = vlaneseq
    %v88 = vshrl.u32 %v87, 7
    %v89 = vsub.s32 %v86, %v88
    %v90 = vrot.slane %v76, %v89
    %v91 = vcombine.low %v83, %v90
    %v92 = vcombine.low %v47, %v48
    %v93 = vcombine.low %v49, %v50
    %v95 = vunpack.c.l.s4 1983009808
    %v96 = vunpack.c.0.s8 %v95
    %v97 = vlaneseq
    %v98 = vshrl.u32 %v97, 7
    %v99 = vsub.s32 %v96, %v98
    %v100 = vrot.slane %v92, %v99
    %v102 = vunpack.c.l.s4 1983009808
    %v103 = vunpack.c.0.s8 %v102
    %v104 = vlaneseq
    %v105 = vshrl.u32 %v104, 7
    %v106 = vsub.s32 %v103, %v105
    %v107 = vrot.slane %v93, %v106
    %v108 = vcombine.low %v100, %v107
    %vm109 = vcmask 130048
    %v110 = vsel %vm109, %v91, 0
    %v112 = vsel %vm109, %v108, 0
    %114 = vmatprep.subr.mxu0 0.0
    %115 = vmatpush1.msra.mxu0 0.0
    %116 = vmatprep.subr.mxu0 0.0
    %117 = vmatpush1.msra.mxu0 0.0
    %118 = vmatprep.subr.mxu0 0.0
    %119 = vmatpush1.msra.mxu0 0.0
    %120 = vmatprep.subr.mxu0 0.0
    %121 = vmatpush1.msra.mxu0 0.0
    %122 = vmatprep.subr.mxu0 0.0
    %123 = vmatpush1.msra.mxu0 0.0
    %124 = vmatprep.subr.mxu0 0.0
    %125 = vmatpush1.msra.mxu0 0.0
    %126 = vmatprep.subr.mxu0 0.0
    %127 = vmatpush1.msra.mxu0 0.0
    %128 = vmatprep.subr.mxu0 0.0
    %129 = vmatpush1.msra.mxu0 0.0
    %130 = vmatprep.subr.mxu0 0.0
    %131 = vmatpush1.msra.mxu0 0.0
    %132 = vmatprep.subr.mxu0 0.0
    %133 = vmatpush1.msra.mxu0 0.0
    %134 = vmatprep.subr.mxu0 0.0
    %135 = vmatpush1.msra.mxu0 0.0
    %136 = vmatprep.subr.mxu0 0.0
    %137 = vmatpush1.msra.mxu0 0.0
    %138 = vmatprep.subr.mxu0 0.0
    %139 = vmatpush1.msra.mxu0 0.0
    %140 = vmatprep.subr.mxu0 0.0
    %141 = vmatpush1.msra.mxu0 0.0
    %142 = vmatprep.subr.mxu0 %v54
    %143 = vmatpush1.msra.mxu0 %v53
    %144 = vmatprep.subr.mxu0 %v52
    %145 = vmatpush1.msra.mxu0 %v51
    %146 = vmatprep.subr.mxu0 0.0
    %147 = vmatpush2.msra.mxu0 0.0
    %148 = vmatprep.subr.mxu0 0.0
    %149 = vmatpush2.msra.mxu0 0.0
    %150 = vmatprep.subr.mxu0 0.0
    %151 = vmatpush2.msra.mxu0 0.0
    %152 = vmatprep.subr.mxu0 0.0
    %153 = vmatpush2.msra.mxu0 0.0
    %154 = vmatprep.subr.mxu0 0.0
    %155 = vmatpush2.msra.mxu0 0.0
    %156 = vmatprep.subr.mxu0 0.0
    %157 = vmatpush2.msra.mxu0 0.0
    %158 = vmatprep.subr.mxu0 0.0
    %159 = vmatpush2.msra.mxu0 0.0
    %160 = vmatprep.subr.mxu0 0.0
    %161 = vmatpush2.msra.mxu0 0.0
    %162 = vmatprep.subr.mxu0 0.0
    %163 = vmatpush2.msra.mxu0 0.0
    %164 = vmatprep.subr.mxu0 0.0
    %165 = vmatpush2.msra.mxu0 0.0
    %166 = vmatprep.subr.mxu0 0.0
    %167 = vmatpush2.msra.mxu0 0.0
    %168 = vmatprep.subr.mxu0 0.0
    %169 = vmatpush2.msra.mxu0 0.0
    %170 = vmatprep.subr.mxu0 0.0
    %171 = vmatpush2.msra.mxu0 0.0
    %172 = vmatprep.subr.mxu0 0.0
    %173 = vmatpush2.msra.mxu0 0.0
    %174 = vmatprep.subr.mxu0 0.0
    %175 = vmatpush2.msra.mxu0 0.0
    %176 = vmatprep.subr.mxu0 0.0
    %177 = vmatpush2.msra.mxu0 0.0
    %178 = vmatprep.mubr.f32.mxu0 0.0
    %179 = vmatmul.mubr.f32.gmra.mxu0 %v110
    %v180 = vpop.f32.mrf.mxu0
    %v181 = vadd.f32 %v60, %v180
    %v182 = vpop.f32.mrf.mxu0
    %v183 = vadd.f32 %v64, %v182
    %184 = vmatprep.mubr.f32.mxu0 0.0
    %185 = vmatmul.mubr.f32.gmra.mxu0 %v112
    %v186 = vpop.f32.mrf.mxu0
    %v187 = vadd.f32 %v60, %v186
    %v188 = vpop.f32.mrf.mxu0
    %v189 = vadd.f32 %v64, %v188
    %190 = vdwg.mxu0
    %v195 = vcombine.low %v181, %v183
    %v196 = vcombine.high %v181, %v183
    %v198 = vunpack.c.l.s4 1983009808
    %v199 = vunpack.c.0.s8 %v198
    %v200 = vlaneseq
    %v201 = vshrl.u32 %v200, 7
    %v202 = vsub.s32 %v199, %v201
    %v203 = vrot.slane %v195, %v202
    %v205 = vunpack.c.l.s4 1983009808
    %v206 = vunpack.c.0.s8 %v205
    %v207 = vlaneseq
    %v208 = vshrl.u32 %v207, 7
    %v209 = vsub.s32 %v206, %v208
    %v210 = vrot.slane %v196, %v209
    %v211 = vcombine.high %v203, %v203
    %v212 = vcombine.high %v210, %v210
    %v213 = vcombine.low %v187, %v189
    %v214 = vcombine.high %v187, %v189
    %v216 = vunpack.c.l.s4 1983009808
    %v217 = vunpack.c.0.s8 %v216
    %v218 = vlaneseq
    %v219 = vshrl.u32 %v218, 7
    %v220 = vsub.s32 %v217, %v219
    %v221 = vrot.slane %v213, %v220
    %v223 = vunpack.c.l.s4 1983009808
    %v224 = vunpack.c.0.s8 %v223
    %v225 = vlaneseq
    %v226 = vshrl.u32 %v225, 7
    %v227 = vsub.s32 %v224, %v226
    %v228 = vrot.slane %v214, %v227
    %v229 = vcombine.high %v221, %v221
    %v230 = vcombine.high %v228, %v228
    %239 = vst [vmem:[#allocation7] sm:$0xf] %v203
    %240 = vst [vmem:[#allocation7 + $0x4] sm:$0xf] %v211
    %241 = vst [vmem:[#allocation7 + $0x8] sm:$0xf] %v210
    %242 = vst [vmem:[#allocation7 + $0xc] sm:$0xf] %v212
    %243 = vst [vmem:[#allocation7 + $0x10] sm:$0xf] %v221
    %244 = vst [vmem:[#allocation7 + $0x14] sm:$0xf] %v229
    %245 = vst [vmem:[#allocation7 + $0x18] sm:$0xf] %v228
    %246 = vst [vmem:[#allocation7 + $0x1c] sm:$0xf] %v230
    // Predicated region
    $region22: #{tpu_custom_call.1} parent=1 // pred_check
      _
    $region23: #{tpu_custom_call.1} parent=1 // pred_check_branch
      %248 = sbr.rel (0) target = $region25
    $region24: #{tpu_custom_call.1} parent=1 // pred_region
      %s250 = ssub.s32 512, 512
      %251 = vsyncadd [#allocation4], %s250
      %s252 = sshll.u32 [#allocation7], 4
      %s253 = int_to_ptr.vmem [resolvable:$true] %s252
      %258 = dma.vmem_to_hbm [thread:$0]  %s253, 512, %s3, [#allocation4], 64, 64, 4
    $region25: #{tpu_custom_call.1} parent=1 // pred_fallthru
      _
    // Predicated region
    $region26: #{tpu_custom_call.1} parent=1 // pred_check
      _
    $region27: #{tpu_custom_call.1} parent=1 // pred_check_branch
      %260 = sbr.rel (0) target = $region29
    $region28: #{tpu_custom_call.1} parent=1 // pred_region
      %261 = dma.done [#allocation4], 512
    $region29: #{tpu_custom_call.1} parent=1 // pred_fallthru
      _
    %262 = vsyncpa [#allocation3], 1
    %263 = vsyncpa [#allocation6], 1
    %264 = vsyncpa [#allocation4], 1

</llo_original>
